<compile_context>
chip_gen: v6e
topology: v6e:2x2x1
jax: 0.10.0
libtpu: 0.0.40
codegen_flags: <defaults>
</compile_context>

<pallas_src>
from functools import partial

import jax
import jax.numpy as jnp
from jax.experimental import pallas as pl
from jax.experimental.pallas import tpu as pltpu


def _round_up(x, m):
    return ((x + m - 1) // m) * m


# ---------------------------------------------------------------------------
# Pass 1: conv (im2col matmul) + max-pool + per-channel partial BN statistics
# ---------------------------------------------------------------------------
def _conv_pool_stats_kernel(patches_ref, w_ref, sel_ref, pmask_ref,
                            y_ref, stats_ref, *, C_in):
    # patches_ref: (1, 9*C_in, T)  w_ref: (C_p, 9*C_in)  sel_ref: (C_p, C_in)
    # pmask_ref:   (1, T)          y_ref: (1, C_p, T)    stats_ref: (1, C_p, 2)
    @pl.when(pl.program_id(1) == 0)
    def _():
        stats_ref[...] = jnp.zeros_like(stats_ref)

    patches = patches_ref[0]                                    # (9*C_in, T)

    # conv branch: channels (sublanes) x spatial (lanes), one MXU matmul
    conv = jnp.dot(w_ref[...], patches,
                   preferred_element_type=jnp.float32)          # (C_p, T)

    # pool branch: max of the 4 centre im2col taps (kh, kw in {1, 2});
    # only these 4*C_in sublane rows are upcast to f32.
    def tap(kh, kw):
        j = (kh * 3 + kw) * C_in
        return patches[j:j + C_in, :].astype(jnp.float32)

    pool = jnp.maximum(jnp.maximum(tap(1, 1), tap(1, 2)),
                       jnp.maximum(tap(2, 1), tap(2, 2)))       # (C_in, T)
    pool = pool * pmask_ref[...]                                # F.pad zeros

    # scatter pooled channels into sublanes [C_conv, C_conv+C_in) on the MXU
    y = conv + jnp.dot(sel_ref[...], pool,
                       preferred_element_type=jnp.float32)      # (C_p, T)

    y_ref[0] = y.astype(y_ref.dtype)

    # per-channel partial sums; padded spatial lanes are exactly 0 (no bias),
    # so no row-validity mask is needed.  Lane reduce -> XLU, one VPU multiply.
    s1 = jnp.sum(y, axis=1, keepdims=True)                      # (C_p, 1)
    s2 = jnp.sum(y * y, axis=1, keepdims=True)                  # (C_p, 1)
    stats_ref[0] += jnp.concatenate([s1, s2], axis=1)           # (C_p, 2)


# ---------------------------------------------------------------------------
# Pass 2: folded BatchNorm affine + ReLU (streaming, memory-bound)
# ---------------------------------------------------------------------------
def _bn_relu_kernel(y_ref, scale_ref, shift_ref, out_ref):
    y = y_ref[0].astype(jnp.float32)                            # (C_p, T)
    out_ref[0] = jnp.maximum(y * scale_ref[...] + shift_ref[...], 0.0)


# ---------------------------------------------------------------------------
# Wrapper: layout plumbing only (NCHW-native im2col, padding, reshape)
# ---------------------------------------------------------------------------
def downsampler_block(x_nchw, w, b, gamma, beta, *, eps=1e-3, block_hw=1024,
                      matmul_dtype=jnp.float32, y_pre_dtype=jnp.bfloat16):
    """Pallas implementation of DownsamplerBlock.forward (NCHW in / NCHW out)."""
    del b  # conv bias cancels exactly through training-mode BatchNorm
    N, C_in, H, W = x_nchw.shape
    C_conv = w.shape[0]                       # out_channel - in_channel
    C_out = C_conv + C_in
    H2 = (H - 1) // 2 + 1                     # conv: k=3, stride=2, pad=1
    W2 = (W - 1) // 2 + 1
    Hp, Wp = H // 2, W // 2                   # max-pool 2x2 / stride 2 (VALID)
    HW = H2 * W2
    K9 = 9 * C_in
    C_p = _round_up(C_out, 8)                 # channels live on sublanes

    # spatial (lane-axis) tiling
    if HW <= block_hw:
        T_hw, S, HW_pad = HW, 1, HW
    else:
        T_hw = _round_up(block_hw, 128)
        S = pl.cdiv(HW, T_hw)
        HW_pad = S * T_hw

    # im2col directly in NCHW layout (no input transpose) -> (N, 9*C_in, HW)
    x = x_nchw.astype(matmul_dtype)           # early cast: replicated stream
    xp = jnp.pad(x, ((0, 0), (0, 0), (1, 1), (1, 1)))
    cols = []
    for kh in range(3):
        for kw in range(3):
            cols.append(xp[:, :, kh:kh + 2 * H2:2, kw:kw + 2 * W2:2])
    patches = jnp.concatenate(cols, axis=1).reshape(N, K9, HW)
    if HW_pad != HW:
        patches = jnp.pad(patches, ((0, 0), (0, 0), (0, HW_pad - HW)))
    # TODO(synk): replace the 9x im2col replication with halo-tiled manual-DMA
    # input windows to further cut wrapper-side HBM traffic.

    # conv weight (C_conv, C_in, 3, 3) -> (C_p, 9*C_in), zero-padded sublanes
    w2 = jnp.transpose(w, (0, 2, 3, 1)).reshape(C_conv, K9)
    w2 = jnp.pad(w2, ((0, C_p - C_conv), (0, 0))).astype(matmul_dtype)

    # pool-scatter constant: output channel (C_conv + c) <- pooled channel c
    sel = (jnp.arange(C_p)[:, None] == jnp.arange(C_in)[None, :] + C_conv)
    sel = sel.astype(jnp.float32)

    # pool validity over spatial positions (F.pad zero region for odd H / W)
    p = jnp.arange(HW_pad, dtype=jnp.int32)
    pmask = ((p < HW) & (p // W2 < Hp) & (p % W2 < Wp)).astype(jnp.float32)
    pmask = pmask.reshape(1, HW_pad)

    kern1 = partial(_conv_pool_stats_kernel, C_in=C_in)
    y_pre, stats = pl.pallas_call(
        kern1,
        grid=(N, S),
        in_specs=[pl.BlockSpec((1, K9, T_hw), lambda n, s: (n, 0, s)),
                  pl.BlockSpec((C_p, K9), lambda n, s: (0, 0)),
                  pl.BlockSpec((C_p, C_in), lambda n, s: (0, 0)),
                  pl.BlockSpec((1, T_hw), lambda n, s: (0, s))],
        out_specs=(pl.BlockSpec((1, C_p, T_hw), lambda n, s: (n, 0, s)),
                   pl.BlockSpec((1, C_p, 2), lambda n, s: (n, 0, 0))),
        out_shape=(jax.ShapeDtypeStruct((N, C_p, HW_pad), y_pre_dtype),
                   jax.ShapeDtypeStruct((N, C_p, 2), jnp.float32)),
        compiler_params=pltpu.CompilerParams(
            dimension_semantics=("parallel", "arbitrary"),
            vmem_limit_bytes=32 * 1024 * 1024),
    )(patches, w2, sel, pmask)

    # Fold the batch statistics into a per-channel affine (tiny, plain JAX).
    # Per-image partials are combined here (pairwise over N).
    # TODO(synk): for very large N*H2*W2 consider a centered / Welford pass.
    count = N * HW
    ssum = jnp.sum(stats, axis=0)                               # (C_p, 2)
    mean = ssum[:, 0] / count
    var = jnp.maximum(ssum[:, 1] / count - mean * mean, 0.0)
    gamma_p = jnp.pad(gamma.astype(jnp.float32), (0, C_p - C_out))
    beta_p = jnp.pad(beta.astype(jnp.float32), (0, C_p - C_out))
    scale = (gamma_p * jax.lax.rsqrt(var + eps)).reshape(C_p, 1)
    shift = (beta_p - mean * scale[:, 0]).reshape(C_p, 1)

    out = pl.pallas_call(
        _bn_relu_kernel,
        grid=(N, S),
        in_specs=[pl.BlockSpec((1, C_p, T_hw), lambda n, s: (n, 0, s)),
                  pl.BlockSpec((C_p, 1), lambda n, s: (0, 0)),
                  pl.BlockSpec((C_p, 1), lambda n, s: (0, 0))],
        out_specs=pl.BlockSpec((1, C_p, T_hw), lambda n, s: (n, 0, s)),
        out_shape=jax.ShapeDtypeStruct((N, C_p, HW_pad), jnp.float32),
        compiler_params=pltpu.CompilerParams(
            dimension_semantics=("parallel", "parallel"),
            vmem_limit_bytes=32 * 1024 * 1024),
    )(y_pre, scale, shift)

    # NCHW falls out: slice off channel / spatial padding, then a pure reshape.
    return out[:, :C_out, :HW].reshape(N, C_out, H2, W2)


# ---------------------------------------------------------------------------
# Pure-JAX reference mirroring the PyTorch forward (training-mode BN)
# ---------------------------------------------------------------------------
def _reference(x, w, b, gamma, beta, eps=1e-3):
    C_conv = w.shape[0]
    C_out = C_conv + x.shape[1]
    x2 = jax.lax.conv_general_dilated(
        x, w, window_strides=(2, 2), padding=((1, 1), (1, 1)),
        dimension_numbers=("NCHW", "OIHW", "NCHW")) + b.reshape(1, C_conv, 1, 1)
    x1 = jax.lax.reduce_window(x, jnp.float32(-jnp.inf), jax.lax.max,
                               (1, 1, 2, 2), (1, 1, 2, 2), "VALID")
    dY, dX = x2.shape[2] - x1.shape[2], x2.shape[3] - x1.shape[3]
    x1 = jnp.pad(x1, ((0, 0), (0, 0),
                      (dY // 2, dY - dY // 2), (dX // 2, dX - dX // 2)))
    y = jnp.concatenate([x2, x1], axis=1)
    mean = y.mean(axis=(0, 2, 3), keepdims=True)
    var = ((y - mean) ** 2).mean(axis=(0, 2, 3), keepdims=True)
    y = (y - mean) / jnp.sqrt(var + eps)
    y = y * gamma.reshape(1, C_out, 1, 1) + beta.reshape(1, C_out, 1, 1)
    return jnp.maximum(y, 0.0)


if __name__ == "__main__":
    key = jax.random.PRNGKey(0)
    k1, k2, k3, k4, k5, k6 = jax.random.split(key, 6)

    # --- main test shape ----------------------------------------------------
    N, C_in, H, W = 2, 4, 16, 16
    C_out = 16
    C_conv = C_out - C_in

    x = jax.random.normal(k1, (N, C_in, H, W), jnp.float32)
    w = 0.1 * jax.random.normal(k2, (C_conv, C_in, 3, 3), jnp.float32)
    b = 0.1 * jax.random.normal(k3, (C_conv,), jnp.float32)
    gamma = 1.0 + 0.1 * jax.random.normal(k4, (C_out,), jnp.float32)
    beta = 0.1 * jax.random.normal(k5, (C_out,), jnp.float32)

    ref = jax.block_until_ready(_reference(x, w, b, gamma, beta))

    # all-f32 path: tight correctness check
    out_f32 = jax.block_until_ready(downsampler_block(
        x, w, b, gamma, beta,
        matmul_dtype=jnp.float32, y_pre_dtype=jnp.float32))
    assert out_f32.shape == (N, C_out, H // 2, W // 2), out_f32.shape
    assert jnp.allclose(out_f32, ref, atol=2e-3, rtol=2e-3), \
        float(jnp.max(jnp.abs(out_f32 - ref)))

    # bf16 MXU operands + bf16 pre-BN intermediate (recommended on v6e/v7x)
    out_bf16 = jax.block_until_ready(downsampler_block(
        x, w, b, gamma, beta,
        matmul_dtype=jnp.bfloat16, y_pre_dtype=jnp.bfloat16))
    assert jnp.allclose(out_bf16, ref, atol=5e-2, rtol=5e-2), \
        float(jnp.max(jnp.abs(out_bf16 - ref)))

    # --- odd spatial size (exercises the pooled-branch F.pad mask) ----------
    kk = jax.random.split(k6, 10)
    N2, C_in2, H_o, W_o, C_out2 = 1, 3, 15, 17, 8
    C_conv2 = C_out2 - C_in2
    x_o = jax.random.normal(kk[0], (N2, C_in2, H_o, W_o), jnp.float32)
    w_o = 0.1 * jax.random.normal(kk[1], (C_conv2, C_in2, 3, 3), jnp.float32)
    b_o = 0.1 * jax.random.normal(kk[2], (C_conv2,), jnp.float32)
    g_o = 1.0 + 0.1 * jax.random.normal(kk[3], (C_out2,), jnp.float32)
    be_o = 0.1 * jax.random.normal(kk[4], (C_out2,), jnp.float32)

    ref_o = jax.block_until_ready(_reference(x_o, w_o, b_o, g_o, be_o))
    out_o = jax.block_until_ready(downsampler_block(
        x_o, w_o, b_o, g_o, be_o,
        matmul_dtype=jnp.float32, y_pre_dtype=jnp.float32))
    assert out_o.shape == ref_o.shape, (out_o.shape, ref_o.shape)
    assert jnp.allclose(out_o, ref_o, atol=2e-3, rtol=2e-3), \
        float(jnp.max(jnp.abs(out_o - ref_o)))

    # --- larger spatial size (exercises lane-axis tiling + spatial padding) --
    N3, C_in3, H_t, W_t, C_out3 = 2, 8, 40, 40, 24
    C_conv3 = C_out3 - C_in3
    x_t = jax.random.normal(kk[5], (N3, C_in3, H_t, W_t), jnp.float32)
    w_t = 0.1 * jax.random.normal(kk[6], (C_conv3, C_in3, 3, 3), jnp.float32)
    b_t = 0.1 * jax.random.normal(kk[7], (C_conv3,), jnp.float32)
    g_t = 1.0 + 0.1 * jax.random.normal(kk[8], (C_out3,), jnp.float32)
    be_t = 0.1 * jax.random.normal(kk[9], (C_out3,), jnp.float32)

    ref_t = jax.block_until_ready(_reference(x_t, w_t, b_t, g_t, be_t))
    out_t = jax.block_until_ready(downsampler_block(
        x_t, w_t, b_t, g_t, be_t, block_hw=128,
        matmul_dtype=jnp.float32, y_pre_dtype=jnp.float32))
    assert out_t.shape == ref_t.shape, (out_t.shape, ref_t.shape)
    assert jnp.allclose(out_t, ref_t, atol=5e-3, rtol=5e-3), \
        float(jnp.max(jnp.abs(out_t - ref_t)))

    print("KERNEL_OK")
</pallas_src>

<mosaic_0001>
module attributes {stable_mosaic.version = 11 : i64} {
  func.func @_conv_pool_stats_kernel(%arg0: i32, %arg1: i32, %arg2: memref<1x36x64xf32, #tpu.memory_space<vmem>>, %arg3: memref<16x36xf32, #tpu.memory_space<vmem>>, %arg4: memref<16x4xf32, #tpu.memory_space<vmem>>, %arg5: memref<1x64xf32, #tpu.memory_space<vmem>>, %arg6: memref<1x16x64xf32, #tpu.memory_space<vmem>>, %arg7: memref<1x16x2xf32, #tpu.memory_space<vmem>>) attributes {dimension_semantics = [#tpu.dimension_semantics<parallel>, #tpu.dimension_semantics<arbitrary>], iteration_bounds = array<i64: 2, 1>, scalar_prefetch = 0 : i64, scratch_operands = 0 : i64, tpu.core_type = #tpu.core_type<tc>, window_params = [{transform_indices = @transform_0, window_bounds = array<i64: 1, 36, 64>}, {pipeline_mode = #tpu.pipeline_mode<synchronous>, transform_indices = @transform_1, window_bounds = array<i64: 16, 36>}, {pipeline_mode = #tpu.pipeline_mode<synchronous>, transform_indices = @transform_2, window_bounds = array<i64: 16, 4>}, {transform_indices = @transform_3, window_bounds = array<i64: 1, 64>}, {transform_indices = @transform_4, window_bounds = array<i64: 1, 16, 64>}, {transform_indices = @transform_5, window_bounds = array<i64: 1, 16, 2>}]} {
    %c0_i32 = arith.constant 0 : i32
    %0 = arith.cmpi eq, %arg1, %c0_i32 : i32
    %1 = arith.extui %0 : i1 to i32
    %c0_i32_0 = arith.constant 0 : i32
    %2 = arith.cmpi ne, %1, %c0_i32_0 : i32
    scf.if %2 {
      %cst_21 = arith.constant 0.000000e+00 : f32
      %35 = vector.broadcast %cst_21 : f32 to vector<1x16x2xf32>
      %c0_22 = arith.constant 0 : index
      %c0_23 = arith.constant 0 : index
      %c0_24 = arith.constant 0 : index
      %36 = vector.load %arg7[%c0_22, %c0_23, %c0_24] : memref<1x16x2xf32, #tpu.memory_space<vmem>>, vector<1x16x2xf32>
      tpu.vector_store %arg7[%c0_22, %c0_23, %c0_24], %35 {strides = array<i32>} : memref<1x16x2xf32, #tpu.memory_space<vmem>>, vector<1x16x2xf32>,
    } else {
    }
    %c0 = arith.constant 0 : index
    %c0_1 = arith.constant 0 : index
    %c0_2 = arith.constant 0 : index
    %3 = vector.load %arg2[%c0, %c0_1, %c0_2] : memref<1x36x64xf32, #tpu.memory_space<vmem>>, vector<1x36x64xf32>
    %4 = vector.shape_cast %3 : vector<1x36x64xf32> to vector<36x64xf32>
    %c0_3 = arith.constant 0 : index
    %c0_4 = arith.constant 0 : index
    %5 = vector.load %arg3[%c0_3, %c0_4] : memref<16x36xf32, #tpu.memory_space<vmem>>, vector<16x36xf32>
    %cst = arith.constant dense<0.000000e+00> : vector<16x64xf32>
    %6 = tpu.matmul %5, %4, %cst {dimension_numbers = #tpu.dot_dimension_numbers<[1], [0], [0], [1], [0, 0, 1, 1], [], []>} : vector<16x36xf32>, vector<36x64xf32>, vector<16x64xf32> -> vector<16x64xf32>
    %7 = vector.extract_strided_slice %4 {offsets = [16, 0], sizes = [4, 64], strides = [1, 1]} : vector<36x64xf32> to vector<4x64xf32>
    %8 = vector.extract_strided_slice %4 {offsets = [20, 0], sizes = [4, 64], strides = [1, 1]} : vector<36x64xf32> to vector<4x64xf32>
    %9 = arith.maximumf %7, %8 : vector<4x64xf32>
    %10 = vector.extract_strided_slice %4 {offsets = [28, 0], sizes = [4, 64], strides = [1, 1]} : vector<36x64xf32> to vector<4x64xf32>
    %11 = vector.extract_strided_slice %4 {offsets = [32, 0], sizes = [4, 64], strides = [1, 1]} : vector<36x64xf32> to vector<4x64xf32>
    %12 = arith.maximumf %10, %11 : vector<4x64xf32>
    %13 = arith.maximumf %9, %12 : vector<4x64xf32>
    %c0_5 = arith.constant 0 : index
    %c0_6 = arith.constant 0 : index
    %14 = vector.load %arg5[%c0_5, %c0_6] : memref<1x64xf32, #tpu.memory_space<vmem>>, vector<1x64xf32>
    %15 = vector.broadcast %14 : vector<1x64xf32> to vector<4x64xf32>
    %16 = arith.mulf %13, %15 : vector<4x64xf32>
    %c0_7 = arith.constant 0 : index
    %c0_8 = arith.constant 0 : index
    %17 = vector.load %arg4[%c0_7, %c0_8] : memref<16x4xf32, #tpu.memory_space<vmem>>, vector<16x4xf32>
    %cst_9 = arith.constant dense<0.000000e+00> : vector<16x64xf32>
    %18 = tpu.matmul %17, %16, %cst_9 {dimension_numbers = #tpu.dot_dimension_numbers<[1], [0], [0], [1], [0, 0, 1, 1], [], []>} : vector<16x4xf32>, vector<4x64xf32>, vector<16x64xf32> -> vector<16x64xf32>
    %19 = arith.addf %6, %18 : vector<16x64xf32>
    %c0_10 = arith.constant 0 : index
    %c0_11 = arith.constant 0 : index
    %c0_12 = arith.constant 0 : index
    %20 = vector.load %arg6[%c0_10, %c0_11, %c0_12] : memref<1x16x64xf32, #tpu.memory_space<vmem>>, vector<1x16x64xf32>
    %21 = vector.shape_cast %20 : vector<1x16x64xf32> to vector<16x64xf32>
    %22 = vector.shape_cast %19 : vector<16x64xf32> to vector<1x16x64xf32>
    tpu.vector_store %arg6[%c0_10, %c0_11, %c0_12], %22 {strides = array<i32>} : memref<1x16x64xf32, #tpu.memory_space<vmem>>, vector<1x16x64xf32>,
    %cst_13 = arith.constant dense<0.000000e+00> : vector<16xf32>
    %23 = vector.multi_reduction <add>, %19, %cst_13 [1] : vector<16x64xf32> to vector<16xf32>
    %24 = vector.shape_cast %23 : vector<16xf32> to vector<16x1xf32>
    %25 = arith.mulf %19, %19 : vector<16x64xf32>
    %cst_14 = arith.constant dense<0.000000e+00> : vector<16xf32>
    %26 = vector.multi_reduction <add>, %25, %cst_14 [1] : vector<16x64xf32> to vector<16xf32>
    %27 = vector.shape_cast %26 : vector<16xf32> to vector<16x1xf32>
    %c0_15 = arith.constant 0 : index
    %c0_16 = arith.constant 0 : index
    %c0_17 = arith.constant 0 : index
    %28 = vector.load %arg7[%c0_15, %c0_16, %c0_17] : memref<1x16x2xf32, #tpu.memory_space<vmem>>, vector<1x16x2xf32>
    %29 = vector.shape_cast %28 : vector<1x16x2xf32> to vector<16x2xf32>
    %30 = tpu.concatenate %24, %27 in 1 : vector<16x1xf32>, vector<16x1xf32> -> vector<16x2xf32>
    %31 = arith.addf %29, %30 : vector<16x2xf32>
    %c0_18 = arith.constant 0 : index
    %c0_19 = arith.constant 0 : index
    %c0_20 = arith.constant 0 : index
    %32 = vector.load %arg7[%c0_18, %c0_19, %c0_20] : memref<1x16x2xf32, #tpu.memory_space<vmem>>, vector<1x16x2xf32>
    %33 = vector.shape_cast %32 : vector<1x16x2xf32> to vector<16x2xf32>
    %34 = vector.shape_cast %31 : vector<16x2xf32> to vector<1x16x2xf32>
    tpu.vector_store %arg7[%c0_18, %c0_19, %c0_20], %34 {strides = array<i32>} : memref<1x16x2xf32, #tpu.memory_space<vmem>>, vector<1x16x2xf32>,
    return
  }
  func.func @transform_0(%arg0: i32, %arg1: i32) -> (i32, i32, i32) {
    %c0_i32 = arith.constant 0 : i32
    %c0_i32_0 = arith.constant 0 : i32
    return %arg0, %c0_i32, %arg1 : i32, i32, i32
  }
  func.func @transform_1(%arg0: i32, %arg1: i32) -> (i32, i32) {
    %c0_i32 = arith.constant 0 : i32
    %c0_i32_0 = arith.constant 0 : i32
    %c0_i32_1 = arith.constant 0 : i32
    return %c0_i32, %c0_i32_0 : i32, i32
  }
  func.func @transform_2(%arg0: i32, %arg1: i32) -> (i32, i32) {
    %c0_i32 = arith.constant 0 : i32
    %c0_i32_0 = arith.constant 0 : i32
    %c0_i32_1 = arith.constant 0 : i32
    return %c0_i32, %c0_i32_0 : i32, i32
  }
  func.func @transform_3(%arg0: i32, %arg1: i32) -> (i32, i32) {
    %c0_i32 = arith.constant 0 : i32
    %c0_i32_0 = arith.constant 0 : i32
    return %c0_i32, %arg1 : i32, i32
  }
  func.func @transform_4(%arg0: i32, %arg1: i32) -> (i32, i32, i32) {
    %c0_i32 = arith.constant 0 : i32
    %c0_i32_0 = arith.constant 0 : i32
    return %arg0, %c0_i32, %arg1 : i32, i32, i32
  }
  func.func @transform_5(%arg0: i32, %arg1: i32) -> (i32, i32, i32) {
    %c0_i32 = arith.constant 0 : i32
    %c0_i32_0 = arith.constant 0 : i32
    %c0_i32_1 = arith.constant 0 : i32
    return %arg0, %c0_i32, %c0_i32_0 : i32, i32, i32
  }
}

</mosaic_0001>

<llo_original>
// kernel: tpu_custom_call.1
$region0: #{tpu_custom_call.1}
  #allocation0 [shape = 'u32[]', space=smem, size = 0x4, offset = 0x4, fixed_abs, tag = 'smem constant byte address 0x4 - core index']
  #allocation1 [shape = 'u32[144,128]{1,0:T(1,128)}', space=vmem, size = 0x12000, scoped, tag = 'internal scratch']
  %s0 = inlined_call_operand.vmem [shape: f32[2,36,64], index: 0, kind: input, shape index: {}]
  %s1 = inlined_call_operand.vmem [shape: f32[16,36], index: 1, kind: input, shape index: {}]
  %s2 = inlined_call_operand.vmem [shape: f32[16,4], index: 2, kind: input, shape index: {}]
  %s3 = inlined_call_operand.vmem [shape: f32[1,64], index: 3, kind: input, shape index: {}]
  %s4 = inlined_call_operand.hbm [shape: f32[2,16,64], index: 4, kind: output, shape index: {0}]
  %s5 = inlined_call_operand.vmem [shape: f32[2,16,2], index: 5, kind: output, shape index: {1}]
  %6 = xla_tuple %s4, %s5
  %s7 = sld [smem:[#allocation0]]
  $region61: #{tpu_custom_call.1} parent=0
    _
  %s9 = ssub.s32 1, %s7
  %s10 = scalar_select 0, %s9, %s7
  $region1: #{tpu_custom_call.1} parent=0
    #allocation2 [shape = 'u8[16384]{0}', space=vmem, size = 0x4000, scoped, tag = 'output window, operand 0']
    #allocation3 [shape = 's32[2]{0}', space=sflag, size = 0x8, scoped, tag = 'scoped memory for tpu_custom_call.1']
    %11 = vsyncpa [#allocation3], 0
    %s12 = scalar_lea.sflag [#allocation3], 1
    %13 = vsyncpa %s12, 0
    loop: start=0, step=1, limit=4
    $region2: #{tpu_custom_call.1} parent=1 // loop_pre_header
      _
    $region3: #{tpu_custom_call.1} parent=1 // loop_header
      %s15 = sphi 0, %s19
      %p16 = scmp.ge.s32.totalorder %s15, 4
      %s22 = sphi 0, %s34
      %s23 = sphi 0, %s30
      %s24 = sphi 0, %s22
      %s25 = sphi 0, %s23
      %s26 = sphi 0, %s24
      %s27 = sphi 0, %s25
      %s39 = sphi 0, %s41
      %s42 = sphi 0, %s39
      %s43 = sphi 0, %s42
      %s59 = sphi 0, %s43
      %s63 = sphi 0, %s63
      %s65 = sphi 0, %s63
      %s66 = sphi 0, %s65
      %s80 = sphi 0, %s66
      %s84 = sphi 0, %s84
      %s86 = sphi 0, %s84
      %s87 = sphi 0, %s86
      %s101 = sphi 0, %s87
      %s107 = sphi 0, %s109
      %s110 = sphi 0, %s107
      %s111 = sphi 0, %s110
      %s127 = sphi 0, %s111
      %s135 = sphi 0, %s137
      %s138 = sphi 0, %s135
      %s139 = sphi 0, %s138
      %s155 = sphi 0, %s139
      %s161 = sphi 0, %s163
      %s164 = sphi 0, %s161
      %s165 = sphi 0, %s164
      %s181 = sphi 0, %s165
    $region4: #{tpu_custom_call.1} parent=1 // loop_header_branch
      %18 = sbr.rel (%p16) target = $region8
    $region5: #{tpu_custom_call.1} parent=1 // loop_body
      %s20 = ssub.s32 %s15, 1
      %s21 = ssub.s32 %s15, 2
      %s28 = sadd.s32 1, %s23
      %p29 = scmp.ge.s32.totalorder %s28, 1
      %s30 = scalar_select %p29, 0, %s28
      %s31 = sadd.s32 1, %s22
      %s32 = scalar_select %p29, %s31, %s22
      %p33 = scmp.ge.s32.totalorder %s32, 2
      %s34 = scalar_select %p33, 0, %s32
      %s35 = ssub.s32 %s22, %s34
      %s36 = ssub.s32 %s23, %s30
      %s37 = sor.u32 %s35, %s36
      %p38 = scmp.eq.s32.totalorder %s37, 0
      %s40 = sadd.s32 %s39, 1
      %s41 = scalar_select %p38, %s39, %s40
      %p44 = pneg %p38
      %p45 = scmp.eq.s32.totalorder %s15, 1
      %p46 = por %p44, %p45
      %p47 = scmp.ne.s32.totalorder %s39, %s42
      %p48 = scmp.eq.s32.totalorder %s15, 0
      %p49 = por %p47, %p48
      %p50 = scmp.ne.s32.totalorder %s39, %s42
      %p51 = scmp.eq.s32.totalorder %s20, 1
      %p52 = por %p50, %p51
      %p53 = scmp.ne.s32.totalorder %s42, %s43
      %p54 = scmp.eq.s32.totalorder %s20, 0
      %p55 = por %p53, %p54
      %p56 = scmp.ne.s32.totalorder %s42, %s43
      %p57 = scmp.eq.s32.totalorder %s21, 1
      %p58 = por %p56, %p57
      %p60 = scmp.ne.s32.totalorder %s43, %s59
      %p61 = scmp.eq.s32.totalorder %s21, 0
      %p62 = por %p60, %p61
      %s64 = sadd.s32 %s63, 1
      %p67 = scmp.eq.s32.totalorder %s15, 1
      %p68 = scmp.ne.s32.totalorder %s63, %s65
      %p69 = scmp.eq.s32.totalorder %s15, 0
      %p70 = por %p68, %p69
      %p71 = scmp.ne.s32.totalorder %s63, %s65
      %p72 = scmp.eq.s32.totalorder %s20, 1
      %p73 = por %p71, %p72
      %p74 = scmp.ne.s32.totalorder %s65, %s66
      %p75 = scmp.eq.s32.totalorder %s20, 0
      %p76 = por %p74, %p75
      %p77 = scmp.ne.s32.totalorder %s65, %s66
      %p78 = scmp.eq.s32.totalorder %s21, 1
      %p79 = por %p77, %p78
      %p81 = scmp.ne.s32.totalorder %s66, %s80
      %p82 = scmp.eq.s32.totalorder %s21, 0
      %p83 = por %p81, %p82
      %s85 = sadd.s32 %s84, 1
      %p88 = scmp.eq.s32.totalorder %s15, 1
      %p89 = scmp.ne.s32.totalorder %s84, %s86
      %p90 = scmp.eq.s32.totalorder %s15, 0
      %p91 = por %p89, %p90
      %p92 = scmp.ne.s32.totalorder %s84, %s86
      %p93 = scmp.eq.s32.totalorder %s20, 1
      %p94 = por %p92, %p93
      %p95 = scmp.ne.s32.totalorder %s86, %s87
      %p96 = scmp.eq.s32.totalorder %s20, 0
      %p97 = por %p95, %p96
      %p98 = scmp.ne.s32.totalorder %s86, %s87
      %p99 = scmp.eq.s32.totalorder %s21, 1
      %p100 = por %p98, %p99
      %p102 = scmp.ne.s32.totalorder %s87, %s101
      %p103 = scmp.eq.s32.totalorder %s21, 0
      %p104 = por %p102, %p103
      %s105 = ssub.s32 %s23, %s30
      %p106 = scmp.eq.s32.totalorder %s105, 0
      %s108 = sadd.s32 %s107, 1
      %s109 = scalar_select %p106, %s107, %s108
      %p112 = pneg %p106
      %p113 = scmp.eq.s32.totalorder %s15, 1
      %p114 = por %p112, %p113
      %p115 = scmp.ne.s32.totalorder %s107, %s110
      %p116 = scmp.eq.s32.totalorder %s15, 0
      %p117 = por %p115, %p116
      %p118 = scmp.ne.s32.totalorder %s107, %s110
      %p119 = scmp.eq.s32.totalorder %s20, 1
      %p120 = por %p118, %p119
      %p121 = scmp.ne.s32.totalorder %s110, %s111
      %p122 = scmp.eq.s32.totalorder %s20, 0
      %p123 = por %p121, %p122
      %p124 = scmp.ne.s32.totalorder %s110, %s111
      %p125 = scmp.eq.s32.totalorder %s21, 1
      %p126 = por %p124, %p125
      %p128 = scmp.ne.s32.totalorder %s111, %s127
      %p129 = scmp.eq.s32.totalorder %s21, 0
      %p130 = por %p128, %p129
      %s131 = ssub.s32 %s22, %s34
      %s132 = ssub.s32 %s23, %s30
      %s133 = sor.u32 %s131, %s132
      %p134 = scmp.eq.s32.totalorder %s133, 0
      %s136 = sadd.s32 %s135, 1
      %s137 = scalar_select %p134, %s135, %s136
      %p140 = pneg %p134
      %p141 = scmp.eq.s32.totalorder %s15, 1
      %p142 = por %p140, %p141
      %p143 = scmp.ne.s32.totalorder %s135, %s138
      %p144 = scmp.eq.s32.totalorder %s15, 0
      %p145 = por %p143, %p144
      %p146 = scmp.ne.s32.totalorder %s135, %s138
      %p147 = scmp.eq.s32.totalorder %s20, 1
      %p148 = por %p146, %p147
      %p149 = scmp.ne.s32.totalorder %s138, %s139
      %p150 = scmp.eq.s32.totalorder %s20, 0
      %p151 = por %p149, %p150
      %p152 = scmp.ne.s32.totalorder %s138, %s139
      %p153 = scmp.eq.s32.totalorder %s21, 1
      %p154 = por %p152, %p153
      %p156 = scmp.ne.s32.totalorder %s139, %s155
      %p157 = scmp.eq.s32.totalorder %s21, 0
      %p158 = por %p156, %p157
      %s159 = ssub.s32 %s22, %s34
      %p160 = scmp.eq.s32.totalorder %s159, 0
      %s162 = sadd.s32 %s161, 1
      %s163 = scalar_select %p160, %s161, %s162
      %p166 = pneg %p160
      %p167 = scmp.eq.s32.totalorder %s15, 1
      %p168 = por %p166, %p167
      %p169 = scmp.ne.s32.totalorder %s161, %s164
      %p170 = scmp.eq.s32.totalorder %s15, 0
      %p171 = por %p169, %p170
      %p172 = scmp.ne.s32.totalorder %s161, %s164
      %p173 = scmp.eq.s32.totalorder %s20, 1
      %p174 = por %p172, %p173
      %p175 = scmp.ne.s32.totalorder %s164, %s165
      %p176 = scmp.eq.s32.totalorder %s20, 0
      %p177 = por %p175, %p176
      %p178 = scmp.ne.s32.totalorder %s164, %s165
      %p179 = scmp.eq.s32.totalorder %s21, 1
      %p180 = por %p178, %p179
      %p182 = scmp.ne.s32.totalorder %s165, %s181
      %p183 = scmp.eq.s32.totalorder %s21, 0
      %p184 = por %p182, %p183
      %p185 = scmp.le.s32.totalorder 1, %s15
      %p186 = scmp.lt.s32.totalorder %s15, 3
      %p187 = pnand %p185, %p186
      %p188 = pneg %p187
      // Predicated region
      $region9: #{tpu_custom_call.1} parent=5 // pred_check
        _
      $region10: #{tpu_custom_call.1} parent=5 // pred_check_branch
        %190 = sbr.rel (%p187) target = $region12
      $region11: #{tpu_custom_call.1} parent=5 // pred_region
        %s191 = ssub.s32 %s15, 1
        // Predicated region
        $region13: #{tpu_custom_call.1} parent=11 // pred_check
          %p192 = pneg %p76
        $region14: #{tpu_custom_call.1} parent=11 // pred_check_branch
          %194 = sbr.rel (%p192) target = $region16
        $region15: #{tpu_custom_call.1} parent=11 // pred_region
          _
        $region16: #{tpu_custom_call.1} parent=11 // pred_fallthru
          _
        // Predicated region
        $region17: #{tpu_custom_call.1} parent=11 // pred_check
          %p195 = pneg %p97
        $region18: #{tpu_custom_call.1} parent=11 // pred_check_branch
          %197 = sbr.rel (%p195) target = $region20
        $region19: #{tpu_custom_call.1} parent=11 // pred_region
          _
        $region20: #{tpu_custom_call.1} parent=11 // pred_fallthru
          _
        // Predicated region
        $region21: #{tpu_custom_call.1} parent=11 // pred_check
          %p198 = pneg %p123
        $region22: #{tpu_custom_call.1} parent=11 // pred_check_branch
          %200 = sbr.rel (%p198) target = $region24
        $region23: #{tpu_custom_call.1} parent=11 // pred_region
          %p201 = scmp.lt.s32.totalorder %s25, 0
          %s202 = scalar_select %p201, %s25, 0
          %s203 = scalar_lea.vmem %s3, %s202
        $region24: #{tpu_custom_call.1} parent=11 // pred_fallthru
          _
      $region12: #{tpu_custom_call.1} parent=5 // pred_fallthru
        _
      %p204 = scmp.lt.s32.totalorder %s15, 2
      // Predicated region
      $region25: #{tpu_custom_call.1} parent=5 // pred_check
        %p205 = pneg %p204
      $region26: #{tpu_custom_call.1} parent=5 // pred_check_branch
        %207 = sbr.rel (%p205) target = $region28
      $region27: #{tpu_custom_call.1} parent=5 // pred_region
        // Predicated region
        $region29: #{tpu_custom_call.1} parent=27 // pred_check
          %p208 = pneg %p49
        $region30: #{tpu_custom_call.1} parent=27 // pred_check_branch
          %210 = sbr.rel (%p208) target = $region32
        $region31: #{tpu_custom_call.1} parent=27 // pred_region
          %p211 = scmp.lt.s32.totalorder %s22, 1
          %s212 = scalar_select %p211, %s22, 1
          %p213 = scmp.lt.s32.totalorder %s23, 0
          %s214 = scalar_select %p213, %s23, 0
          %s215 = smul.addr %s212, 5
          %s216 = sadd.s32 %s214, %s215
          %s217 = smul.addr %s216, 8
          %s218 = scalar_lea.vmem %s0, %s217
        $region32: #{tpu_custom_call.1} parent=27 // pred_fallthru
          _
      $region28: #{tpu_custom_call.1} parent=5 // pred_fallthru
        _
      %p219 = scmp.le.s32.totalorder 1, %s15
      %p220 = scmp.lt.s32.totalorder %s15, 3
      %p221 = pnand %p219, %p220
      %p222 = pneg %p221
      // Predicated region
      $region33: #{tpu_custom_call.1} parent=5 // pred_check
        _
      $region34: #{tpu_custom_call.1} parent=5 // pred_check_branch
        %224 = sbr.rel (%p221) target = $region36
      $region35: #{tpu_custom_call.1} parent=5 // pred_region
        %s225 = ssub.s32 %s15, 1
        %p226 = scmp.lt.s32.totalorder %s24, 1
        %s227 = scalar_select %p226, %s24, 1
        %p228 = scmp.lt.s32.totalorder %s25, 0
        %s229 = scalar_select %p228, %s25, 0
        %s230 = smul.addr %s227, 5
        %s231 = sadd.s32 %s229, %s230
        %s232 = smul.addr %s231, 8
        %s233 = scalar_lea.vmem %s0, %s232
        %p234 = pneg %p55
        %p235 = pneg %p52
        %p236 = pneg %p76
        %p237 = pneg %p73
        %p238 = pneg %p97
        %p239 = pneg %p94
        %p240 = scmp.lt.s32.totalorder %s25, 0
        %s241 = scalar_select %p240, %s25, 0
        %s242 = scalar_lea.vmem %s3, %s241
        %p243 = pneg %p123
        %p244 = pneg %p120
        %p245 = pneg %p151
        %p246 = pneg %p148
        %s247 = sand.u32 %s138, 1
        %s248 = scalar_lea.sflag [#allocation3], %s247
        %s249 = sand.u32 %s138, 1
        %s250 = smul.addr %s249, 16
        %s251 = scalar_lea.vmem [#allocation2], %s250
        %p252 = pneg %p177
        %p253 = pneg %p174
        %p254 = scmp.lt.s32.totalorder %s24, 1
        %s255 = scalar_select %p254, %s24, 1
        %s256 = smul.addr %s255, 2
        %s257 = smul.addr %s256, 8
        %s258 = scalar_lea.vmem %s5, %s257
        %p259 = scmp.lt.s32.totalorder %s24, 1
        %s260 = scalar_select %p259, %s24, 1
        %p261 = scmp.lt.s32.totalorder %s25, 0
        %s262 = scalar_select %p261, %s25, 0
        %s263 = smul.addr %s260, 5
        %s264 = sadd.s32 %s262, %s263
        %s265 = smul.addr %s264, 8
        %s266 = scalar_lea.vmem %s0, %s265
        %p267 = scmp.lt.s32.totalorder %s25, 0
        %s268 = scalar_select %p267, %s25, 0
        %s269 = scalar_lea.vmem %s3, %s268
        %p270 = scmp.lt.s32.totalorder %s24, 1
        %s271 = scalar_select %p270, %s24, 1
        %s272 = smul.addr %s271, 2
        %s273 = smul.addr %s272, 8
        %s274 = scalar_lea.vmem %s5, %s273
        %p275 = scmp.eq.s32.totalorder %s25, 0
        // Predicated region
        $region37: #{tpu_custom_call.1} parent=35 // pred_check
          %p276 = pneg %p275
        $region38: #{tpu_custom_call.1} parent=35 // pred_check_branch
          %278 = sbr.rel (%p276) target = $region40
        $region39: #{tpu_custom_call.1} parent=35 // pred_region
          %vm279 = vcmask 15360
          %280 = vst.msk [vmem:[%s274] sm:$0xff] %vm279, 0.0
          %281 = vst.msk [vmem:[%s274 + $0x8] sm:$0xff] %vm279, 0.0
        $region40: #{tpu_custom_call.1} parent=35 // pred_fallthru
          _
        %v282 = vld [vmem:[%s266] sm:$0xff]
        %v283 = vld [vmem:[%s266 + $0x8] sm:$0xff]
        %v284 = vld [vmem:[%s266 + $0x10] sm:$0xff]
        %v285 = vld [vmem:[%s266 + $0x18] sm:$0xff]
        %v286 = vld [vmem:[%s266 + $0x20] sm:$0xf]
        %v287 = vld [vmem:[%s1] sm:$0xff]
        %v288 = vld [vmem:[%s1 + $0x8] sm:$0xff]
        %v290 = vrot.slane %v284, 4
        %v292 = vmax.f32 %v284, %v290
        %v294 = vrot.slane %v286, 4
        %v296 = vmax.f32 %v285, %v294
        %v298 = vrot.slane %v296, 4
        %v300 = vmax.f32 %v292, %v298
        %v301 = vld [vmem:[%s269] sm:$0x1]
        %v303 = vlaneseq
        %v304 = vshrl.u32 %v303, 7
        %v305 = vsub.s32 0, %v304
        %v306 = vrot.slane %v301, %v305
        %v308 = vmul.f32 %v300, %v306
        %v309 = vld [vmem:[%s2] sm:$0xff]
        %v310 = vld [vmem:[%s2 + $0x8] sm:$0xff]
        %vm311 = vcmask 31744
        %v313 = vsel %vm311, %v309, 0
        %v316 = vsel %vm311, %v310, 0
        %vm318 = vcmask 1043456
        %v320 = vsel %vm318, %v308, 0
        %322 = vmatprep.subr.mxu0 0.0
        %323 = vmatpush1.msra.mxu0 0.0
        %324 = vmatprep.subr.mxu0 0.0
        %325 = vmatpush1.msra.mxu0 0.0
        %326 = vmatprep.subr.mxu0 0.0
        %327 = vmatpush1.msra.mxu0 0.0
        %328 = vmatprep.subr.mxu0 0.0
        %329 = vmatpush1.msra.mxu0 0.0
        %330 = vmatprep.subr.mxu0 0.0
        %331 = vmatpush1.msra.mxu0 0.0
        %332 = vmatprep.subr.mxu0 0.0
        %333 = vmatpush1.msra.mxu0 0.0
        %334 = vmatprep.subr.mxu0 0.0
        %335 = vmatpush1.msra.mxu0 0.0
        %336 = vmatprep.subr.mxu0 0.0
        %337 = vmatpush1.msra.mxu0 0.0
        %338 = vmatprep.subr.mxu0 0.0
        %339 = vmatpush1.msra.mxu0 0.0
        %340 = vmatprep.subr.mxu0 0.0
        %341 = vmatpush1.msra.mxu0 0.0
        %342 = vmatprep.subr.mxu0 0.0
        %343 = vmatpush1.msra.mxu0 0.0
        %344 = vmatprep.subr.mxu0 0.0
        %345 = vmatpush1.msra.mxu0 0.0
        %346 = vmatprep.subr.mxu0 0.0
        %347 = vmatpush1.msra.mxu0 0.0
        %348 = vmatprep.subr.mxu0 0.0
        %349 = vmatpush1.msra.mxu0 0.0
        %350 = vmatprep.subr.mxu0 0.0
        %351 = vmatpush1.msra.mxu0 0.0
        %352 = vmatprep.subr.mxu0 0.0
        %353 = vmatpush1.msra.mxu0 %v320
        %354 = vmatprep.subr.mxu0 0.0
        %355 = vmatpush2.msra.mxu0 0.0
        %356 = vmatprep.subr.mxu0 0.0
        %357 = vmatpush2.msra.mxu0 0.0
        %358 = vmatprep.subr.mxu0 0.0
        %359 = vmatpush2.msra.mxu0 0.0
        %360 = vmatprep.subr.mxu0 0.0
        %361 = vmatpush2.msra.mxu0 0.0
        %362 = vmatprep.subr.mxu0 0.0
        %363 = vmatpush2.msra.mxu0 0.0
        %364 = vmatprep.subr.mxu0 0.0
        %365 = vmatpush2.msra.mxu0 0.0
        %366 = vmatprep.subr.mxu0 0.0
        %367 = vmatpush2.msra.mxu0 0.0
        %368 = vmatprep.subr.mxu0 0.0
        %369 = vmatpush2.msra.mxu0 0.0
        %370 = vmatprep.subr.mxu0 0.0
        %371 = vmatpush2.msra.mxu0 0.0
        %372 = vmatprep.subr.mxu0 0.0
        %373 = vmatpush2.msra.mxu0 0.0
        %374 = vmatprep.subr.mxu0 0.0
        %375 = vmatpush2.msra.mxu0 0.0
        %376 = vmatprep.subr.mxu0 0.0
        %377 = vmatpush2.msra.mxu0 0.0
        %378 = vmatprep.subr.mxu0 0.0
        %379 = vmatpush2.msra.mxu0 0.0
        %380 = vmatprep.subr.mxu0 0.0
        %381 = vmatpush2.msra.mxu0 0.0
        %382 = vmatprep.subr.mxu0 0.0
        %383 = vmatpush2.msra.mxu0 0.0
        %384 = vmatprep.subr.mxu0 0.0
        %385 = vmatpush2.msra.mxu0 0.0
        %386 = vmatprep.mubr.f32.mxu0 0.0
        %387 = vmatmul.mubr.f32.gmra.mxu0 %v313
        %v388 = vpop.f32.mrf.mxu0
        %v389 = vadd.f32 0.0, %v388
        %v390 = vpop.f32.mrf.mxu0
        %391 = vmatprep.mubr.f32.mxu0 0.0
        %392 = vmatmul.mubr.f32.gmra.mxu0 %v316
        %v393 = vpop.f32.mrf.mxu0
        %v394 = vadd.f32 0.0, %v393
        %v395 = vpop.f32.mrf.mxu0
        %396 = vdwg.mxu0
        %vm397 = vcmask 293888
        %v399 = vsel %vm397, %v287, 0
        %v402 = vsel %vm397, %v288, 0
        %v404 = vsel %vm318, %v286, 0
        %406 = vmatprep.subr.mxu0 0.0
        %407 = vmatpush1.msra.mxu0 0.0
        %408 = vmatprep.subr.mxu0 0.0
        %409 = vmatpush1.msra.mxu0 0.0
        %410 = vmatprep.subr.mxu0 0.0
        %411 = vmatpush1.msra.mxu0 0.0
        %412 = vmatprep.subr.mxu0 0.0
        %413 = vmatpush1.msra.mxu0 0.0
        %414 = vmatprep.subr.mxu0 0.0
        %415 = vmatpush1.msra.mxu0 0.0
        %416 = vmatprep.subr.mxu0 0.0
        %417 = vmatpush1.msra.mxu0 0.0
        %418 = vmatprep.subr.mxu0 0.0
        %419 = vmatpush1.msra.mxu0 0.0
        %420 = vmatprep.subr.mxu0 0.0
        %421 = vmatpush1.msra.mxu0 0.0
        %422 = vmatprep.subr.mxu0 0.0
        %423 = vmatpush1.msra.mxu0 0.0
        %424 = vmatprep.subr.mxu0 0.0
        %425 = vmatpush1.msra.mxu0 0.0
        %426 = vmatprep.subr.mxu0 0.0
        %427 = vmatpush1.msra.mxu0 0.0
        %428 = vmatprep.subr.mxu0 0.0
        %429 = vmatpush1.msra.mxu0 %v404
        %430 = vmatprep.subr.mxu0 0.0
        %431 = vmatpush1.msra.mxu0 %v285
        %432 = vmatprep.subr.mxu0 0.0
        %433 = vmatpush1.msra.mxu0 %v284
        %434 = vmatprep.subr.mxu0 0.0
        %435 = vmatpush1.msra.mxu0 %v283
        %436 = vmatprep.subr.mxu0 0.0
        %437 = vmatpush1.msra.mxu0 %v282
        %438 = vmatprep.subr.mxu0 0.0
        %439 = vmatpush2.msra.mxu0 0.0
        %440 = vmatprep.subr.mxu0 0.0
        %441 = vmatpush2.msra.mxu0 0.0
        %442 = vmatprep.subr.mxu0 0.0
        %443 = vmatpush2.msra.mxu0 0.0
        %444 = vmatprep.subr.mxu0 0.0
        %445 = vmatpush2.msra.mxu0 0.0
        %446 = vmatprep.subr.mxu0 0.0
        %447 = vmatpush2.msra.mxu0 0.0
        %448 = vmatprep.subr.mxu0 0.0
        %449 = vmatpush2.msra.mxu0 0.0
        %450 = vmatprep.subr.mxu0 0.0
        %451 = vmatpush2.msra.mxu0 0.0
        %452 = vmatprep.subr.mxu0 0.0
        %453 = vmatpush2.msra.mxu0 0.0
        %454 = vmatprep.subr.mxu0 0.0
        %455 = vmatpush2.msra.mxu0 0.0
        %456 = vmatprep.subr.mxu0 0.0
        %457 = vmatpush2.msra.mxu0 0.0
        %458 = vmatprep.subr.mxu0 0.0
        %459 = vmatpush2.msra.mxu0 0.0
        %460 = vmatprep.subr.mxu0 0.0
        %461 = vmatpush2.msra.mxu0 0.0
        %462 = vmatprep.subr.mxu0 0.0
        %463 = vmatpush2.msra.mxu0 0.0
        %464 = vmatprep.subr.mxu0 0.0
        %465 = vmatpush2.msra.mxu0 0.0
        %466 = vmatprep.subr.mxu0 0.0
        %467 = vmatpush2.msra.mxu0 0.0
        %468 = vmatprep.subr.mxu0 0.0
        %469 = vmatpush2.msra.mxu0 0.0
        %470 = vmatprep.mubr.f32.mxu0 0.0
        %471 = vmatmul.mubr.f32.gmra.mxu0 %v399
        %v472 = vpop.f32.mrf.mxu0
        %v473 = vadd.f32 %v389, %v472
        %v474 = vpop.f32.mrf.mxu0
        %475 = vmatprep.mubr.f32.mxu0 0.0
        %476 = vmatmul.mubr.f32.gmra.mxu0 %v402
        %v477 = vpop.f32.mrf.mxu0
        %v478 = vadd.f32 %v394, %v477
        %v479 = vpop.f32.mrf.mxu0
        %480 = vdwg.mxu0
        %vm481 = vcmask 523264
        %482 = vst.msk [vmem:[%s251] sm:$0xff] %vm481, %v473
        %483 = vst.msk [vmem:[%s251 + $0x8] sm:$0xff] %vm481, %v478
        %v484 = vsel %vm481, %v473, 0.0
        %485 = vadd.xlane.f32.xlu0 %v484
        %v486 = vpop.xlane.xlu0 %485
        %v487 = vsel %vm481, %v478, 0.0
        %488 = vadd.xlane.f32.xlu0 %v487
        %v489 = vpop.xlane.xlu0 %488
        %v490 = vmul.f32 %v473, %v473
        %v491 = vmul.f32 %v478, %v478
        %v492 = vsel %vm481, %v490, 0.0
        %493 = vadd.xlane.f32.xlu0 %v492
        %v494 = vpop.xlane.xlu0 %493
        %v495 = vsel %vm481, %v491, 0.0
        %496 = vadd.xlane.f32.xlu0 %v495
        %v497 = vpop.xlane.xlu0 %496
        %v498 = vld [vmem:[%s274] sm:$0xff]
        %v499 = vld [vmem:[%s274 + $0x8] sm:$0xff]
        %vm500 = vcmask 7168
        %v501 = vsel %vm500, %v486, %v494
        %v502 = vsel %vm500, %v489, %v497
        %v503 = vadd.f32 %v498, %v501
        %v504 = vadd.f32 %v499, %v502
        %vm505 = vcmask 15360
        %506 = vst.msk [vmem:[%s274] sm:$0xff] %vm505, %v503
        %507 = vst.msk [vmem:[%s274 + $0x8] sm:$0xff] %vm505, %v504
        %s508 = sand.u32 %s138, 1
        %s509 = scalar_lea.sflag [#allocation3], %s508
        %s510 = sand.u32 %s138, 1
        %s511 = smul.addr %s510, 16
        %s512 = scalar_lea.vmem [#allocation2], %s511
        %p513 = scmp.lt.s32.totalorder %s24, 1
        %s514 = scalar_select %p513, %s24, 1
        %s515 = smul.addr %s514, 2
        %s516 = smul.addr %s515, 8
        %s517 = scalar_lea.vmem %s5, %s516
        // Predicated region
        $region41: #{tpu_custom_call.1} parent=35 // pred_check
          %p518 = pneg %p148
        $region42: #{tpu_custom_call.1} parent=35 // pred_check_branch
          %520 = sbr.rel (%p518) target = $region44
        $region43: #{tpu_custom_call.1} parent=35 // pred_region
          %s522 = ssub.s32 256, 256
          %523 = vsyncadd %s509, %s522
          %s524 = smul.addr %s24, 2
          %s525 = sadd.s32 %s25, %s524
          %s526 = smul.addr %s525, 128
          %s527 = scalar_lea.hbm %s4, %s526
          %s528 = sshll.u32 %s512, 4
          %s529 = int_to_ptr.vmem [resolvable:$true] %s528
          %534 = dma.vmem_to_hbm [thread:$0]  %s529, 256, %s527, %s509, 128, 128, 8
        $region44: #{tpu_custom_call.1} parent=35 // pred_fallthru
          _
        // Predicated region
        $region45: #{tpu_custom_call.1} parent=35 // pred_check
          %p535 = pneg %p174
        $region46: #{tpu_custom_call.1} parent=35 // pred_check_branch
          %537 = sbr.rel (%p535) target = $region48
        $region47: #{tpu_custom_call.1} parent=35 // pred_region
          _
        $region48: #{tpu_custom_call.1} parent=35 // pred_fallthru
          _
      $region36: #{tpu_custom_call.1} parent=5 // pred_fallthru
        _
      %p538 = scmp.le.s32.totalorder 2, %s15
      // Predicated region
      $region49: #{tpu_custom_call.1} parent=5 // pred_check
        %p539 = pneg %p538
      $region50: #{tpu_custom_call.1} parent=5 // pred_check_branch
        %541 = sbr.rel (%p539) target = $region52
      $region51: #{tpu_custom_call.1} parent=5 // pred_region
        %s542 = ssub.s32 %s15, 2
        // Predicated region
        $region53: #{tpu_custom_call.1} parent=51 // pred_check
          %p543 = pneg %p154
        $region54: #{tpu_custom_call.1} parent=51 // pred_check_branch
          %545 = sbr.rel (%p543) target = $region56
        $region55: #{tpu_custom_call.1} parent=51 // pred_region
          %s546 = sand.u32 %s139, 1
          %s547 = scalar_lea.sflag [#allocation3], %s546
          %s548 = sand.u32 %s139, 1
          %s549 = smul.addr %s548, 16
          %s550 = scalar_lea.vmem [#allocation2], %s549
          %551 = dma.done %s547, 256
        $region56: #{tpu_custom_call.1} parent=51 // pred_fallthru
          _
        // Predicated region
        $region57: #{tpu_custom_call.1} parent=51 // pred_check
          %p552 = pneg %p180
        $region58: #{tpu_custom_call.1} parent=51 // pred_check_branch
          %554 = sbr.rel (%p552) target = $region60
        $region59: #{tpu_custom_call.1} parent=51 // pred_region
          %p555 = scmp.lt.s32.totalorder %s26, 1
          %s556 = scalar_select %p555, %s26, 1
          %s557 = smul.addr %s556, 2
          %s558 = smul.addr %s557, 8
          %s559 = scalar_lea.vmem %s5, %s558
        $region60: #{tpu_custom_call.1} parent=51 // pred_fallthru
          _
      $region52: #{tpu_custom_call.1} parent=5 // pred_fallthru
        _
    $region6: #{tpu_custom_call.1} parent=1 // loop_footer
      %s19 = sadd.s32 1, %s15
    $region7: #{tpu_custom_call.1} parent=1 // loop_footer_branch
      %14 = sbr.rel target = $region3
    $region8: #{tpu_custom_call.1} parent=1 // loop_exit
      _
    %560 = vsyncpa [#allocation3], 1
    %s561 = scalar_lea.sflag [#allocation3], 1
    %562 = vsyncpa %s561, 1

</llo_original>
